<compile_context>
chip_gen: v5e
topology: v5e:2x2
jax: 0.10.0
libtpu: 0.0.40
codegen_flags: <defaults>
</compile_context>

<pallas_src>
import functools

import jax
import jax.numpy as jnp
from jax.experimental import pallas as pl
from jax.experimental.pallas import tpu as pltpu

EPS = 1e-5                      # F.batch_norm default eps
LANE = 128                      # TPU lane width
VMEM_LIMIT = 32 * 1024 * 1024   # safe on v5e/v6e (128 MiB) and v7x (64 MiB)


def _round_up(x, m):
    return (x + m - 1) // m * m


def _pick_m_tile(m, tm_max):
    """Row-tile size (multiple of 8) and padded M (multiple of the tile)."""
    m8 = _round_up(m, 8)
    if m8 <= tm_max:
        return m8, m8
    tm = _round_up(tm_max, 8)
    return tm, _round_up(m, tm)


# ---------------------------------------------------------------------------
# Kernel A: conv tile (im2col matmul, bf16 operands, fp32 acc) + global BN
#           statistics accumulated in resident (1, Cp) outputs.
# ---------------------------------------------------------------------------
def conv_stats_kernel(p_ref, w_ref, s_ref, sum_ref, ssq_ref):
    i = pl.program_id(0)
    s = jnp.dot(p_ref[...], w_ref[...], preferred_element_type=jnp.float32)
    s_ref[...] = s

    @pl.when(i == 0)
    def _():
        sum_ref[...] = jnp.zeros_like(sum_ref)
        ssq_ref[...] = jnp.zeros_like(ssq_ref)

    # zero-padded M rows contribute 0 to both accumulators -> stats stay exact
    sum_ref[...] += jnp.sum(s, axis=0, keepdims=True)
    ssq_ref[...] += jnp.sum(s * s, axis=0, keepdims=True)


def conv_and_stats(patches_p, w_p, tm):
    mp, kp = patches_p.shape
    cp = w_p.shape[1]
    return pl.pallas_call(
        conv_stats_kernel,
        grid=(mp // tm,),
        out_shape=(jax.ShapeDtypeStruct((mp, cp), jnp.float32),
                   jax.ShapeDtypeStruct((1, cp), jnp.float32),
                   jax.ShapeDtypeStruct((1, cp), jnp.float32)),
        in_specs=[pl.BlockSpec((tm, kp), lambda i: (i, 0)),
                  pl.BlockSpec((kp, cp), lambda i: (0, 0))],    # weights resident
        out_specs=(pl.BlockSpec((tm, cp), lambda i: (i, 0)),
                   pl.BlockSpec((1, cp), lambda i: (0, 0)),     # resident accumulators
                   pl.BlockSpec((1, cp), lambda i: (0, 0))),
        compiler_params=pltpu.CompilerParams(
            dimension_semantics=("arbitrary",),                 # reduction axis
            vmem_limit_bytes=VMEM_LIMIT),
    )(patches_p, w_p)


# ---------------------------------------------------------------------------
# Kernel B: fused BN epilogue (+ optional residual) + ReLU, fp32 elementwise.
# ---------------------------------------------------------------------------
def bn_relu_kernel(s_ref, scale_ref, bias_ref, o_ref):
    y = s_ref[...] * scale_ref[...] + bias_ref[...]
    o_ref[...] = jnp.maximum(y, 0.0).astype(o_ref.dtype)


def bn_add_relu_kernel(s_ref, scale_ref, bias_ref, res_ref, o_ref):
    y = s_ref[...] * scale_ref[...] + bias_ref[...] + res_ref[...]
    o_ref[...] = jnp.maximum(y, 0.0).astype(o_ref.dtype)


def bn_apply(s, scale, bias, residual, out_dtype, tm):
    mp, cp = s.shape
    row_spec = pl.BlockSpec((tm, cp), lambda i: (i, 0))
    vec_spec = pl.BlockSpec((1, cp), lambda i: (0, 0))
    if residual is None:
        kernel, args = bn_relu_kernel, (s, scale, bias)
        in_specs = [row_spec, vec_spec, vec_spec]
    else:
        kernel, args = bn_add_relu_kernel, (s, scale, bias, residual)
        in_specs = [row_spec, vec_spec, vec_spec, row_spec]
    return pl.pallas_call(
        kernel,
        grid=(mp // tm,),
        out_shape=jax.ShapeDtypeStruct((mp, cp), out_dtype),
        in_specs=in_specs,
        out_specs=row_spec,
        compiler_params=pltpu.CompilerParams(
            dimension_semantics=("parallel",),                  # megacore-shardable
            vmem_limit_bytes=VMEM_LIMIT),
    )(*args)


# ---------------------------------------------------------------------------
# Host-side layout plumbing (im2col, weight reshape, padding, shortcut)
# ---------------------------------------------------------------------------
def im2col(x_nhwc, ksize, stride, pad):
    """x:(N,H,W,C) -> patches:(N*Ho*Wo, k*k*C), column order (kh, kw, ci)."""
    n, h, w, c = x_nhwc.shape
    xp = jnp.pad(x_nhwc, ((0, 0), (pad, pad), (pad, pad), (0, 0)))
    ho = (h + 2 * pad - ksize) // stride + 1
    wo = (w + 2 * pad - ksize) // stride + 1
    cols = []
    for kh in range(ksize):
        for kw in range(ksize):
            cols.append(xp[:, kh:kh + stride * ho:stride,
                           kw:kw + stride * wo:stride, :])
    patches = jnp.stack(cols, axis=3)                     # (N, Ho, Wo, k*k, C)
    return patches.reshape(n * ho * wo, ksize * ksize * c), (n, ho, wo)


def conv_weight_to_mat(w_oihw):
    """PyTorch (Cout, Cin, kh, kw) -> (kh*kw*Cin, Cout), matching im2col."""
    cout = w_oihw.shape[0]
    return jnp.transpose(w_oihw, (2, 3, 1, 0)).reshape(-1, cout)


def lambda_shortcut_nhwc(x_nhwc, planes):
    """LambdaLayer: x[:, :, ::2, ::2] zero-padded by planes//4 channels each side."""
    y = x_nhwc[:, ::2, ::2, :]
    pc = planes // 4
    return jnp.pad(y, ((0, 0), (0, 0), (0, 0), (pc, pc)))


def _bn_scale_bias(sum_c, ssq_c, gamma_p, beta_p, m_true):
    """Fold BN(train, biased var) into per-channel scale/bias (fp32, (1,Cp))."""
    inv_m = 1.0 / float(m_true)
    mean = sum_c * inv_m
    var = jnp.maximum(ssq_c * inv_m - mean * mean, 0.0)
    scale = gamma_p * jax.lax.rsqrt(var + EPS)
    bias = beta_p - mean * scale
    return scale, bias


def conv_bn_block(x_nhwc, w_oihw, gamma, beta, residual_flat, out_dtype,
                  stride, tm_max):
    """conv3x3(pad=1, no bias) + BN(training=True) + optional residual + ReLU."""
    patches, (n, ho, wo) = im2col(x_nhwc.astype(jnp.bfloat16), 3, stride, 1)
    m, k = patches.shape
    cout = w_oihw.shape[0]
    kp = _round_up(k, LANE)
    cp = _round_up(cout, LANE)
    tm, mp = _pick_m_tile(m, tm_max)

    patches_p = jnp.pad(patches, ((0, mp - m), (0, kp - k)))
    w_p = jnp.pad(conv_weight_to_mat(w_oihw).astype(jnp.bfloat16),
                  ((0, kp - k), (0, cp - cout)))
    gamma_p = jnp.pad(gamma.reshape(1, -1).astype(jnp.float32),
                      ((0, 0), (0, cp - cout)))
    beta_p = jnp.pad(beta.reshape(1, -1).astype(jnp.float32),
                     ((0, 0), (0, cp - cout)))

    s, s_sum, s_ssq = conv_and_stats(patches_p, w_p, tm)
    scale, bias = _bn_scale_bias(s_sum, s_ssq, gamma_p, beta_p, m)

    res_p = None
    if residual_flat is not None:
        res_p = jnp.pad(residual_flat.astype(jnp.float32),
                        ((0, mp - m), (0, cp - cout)))

    out = bn_apply(s, scale, bias, res_p, out_dtype, tm)
    return out[:m, :cout].reshape(n, ho, wo, cout)


def f_basic_block_forward(x_nchw, params, stride, in_planes, planes, tm_max=512):
    """params already contain the perturbed values (base - coef * grad)."""
    x = jnp.transpose(x_nchw, (0, 2, 3, 1)).astype(jnp.float32)   # NCHW -> NHWC

    # conv1 + bn1 + relu (no residual -> skip the all-zero tensor entirely)
    h1 = conv_bn_block(x, params["conv1_w"], params["bn1_w"], params["bn1_b"],
                       residual_flat=None, out_dtype=jnp.bfloat16,
                       stride=stride, tm_max=tm_max)

    # option-A shortcut (or identity), fp32 NHWC
    if stride != 1 or in_planes != planes:
        sc = lambda_shortcut_nhwc(x, planes)
    else:
        sc = x
    n2, ho2, wo2, _ = h1.shape
    sc_flat = sc.reshape(n2 * ho2 * wo2, planes)

    # conv2 + bn2 + shortcut add + relu
    out = conv_bn_block(h1, params["conv2_w"], params["bn2_w"], params["bn2_b"],
                        residual_flat=sc_flat, out_dtype=jnp.float32,
                        stride=1, tm_max=tm_max)
    return jnp.transpose(out, (0, 3, 1, 2))                       # NHWC -> NCHW


# ---------------------------------------------------------------------------
# Pure-JAX fp32 reference (mirrors the PyTorch forward) for correctness check
# ---------------------------------------------------------------------------
def ref_forward(x, params, stride, in_planes, planes):
    def conv(inp, w, s):
        return jax.lax.conv_general_dilated(
            inp, w, (s, s), ((1, 1), (1, 1)),
            dimension_numbers=("NCHW", "OIHW", "NCHW"),
            precision=jax.lax.Precision.HIGHEST)

    def bn(inp, g, b):
        mean = jnp.mean(inp, axis=(0, 2, 3), keepdims=True)
        var = jnp.mean((inp - mean) ** 2, axis=(0, 2, 3), keepdims=True)
        return g.reshape(1, -1, 1, 1) * (inp - mean) * jax.lax.rsqrt(var + EPS) \
            + b.reshape(1, -1, 1, 1)

    out = jax.nn.relu(bn(conv(x, params["conv1_w"], stride),
                         params["bn1_w"], params["bn1_b"]))
    out = bn(conv(out, params["conv2_w"], 1), params["bn2_w"], params["bn2_b"])
    if stride != 1 or in_planes != planes:
        sc = x[:, :, ::2, ::2]
        pc = planes // 4
        sc = jnp.pad(sc, ((0, 0), (pc, pc), (0, 0), (0, 0)))
    else:
        sc = x
    return jax.nn.relu(out + sc)


if __name__ == "__main__":
    key = jax.random.PRNGKey(0)
    N, in_planes, planes, H, W, stride = 2, 4, 8, 16, 16, 2
    coef = 0.1

    ks = jax.random.split(key, 10)
    x = jax.random.normal(ks[0], (N, in_planes, H, W), jnp.float32)

    # Base parameters (PyTorch module shapes) + synthetic grads;
    # generate_dict_params_buffs semantics: param' = param - coef * grad.
    conv1_w = jax.random.normal(ks[1], (planes, in_planes, 3, 3), jnp.float32) * 0.1
    conv2_w = jax.random.normal(ks[2], (planes, planes, 3, 3), jnp.float32) * 0.1
    bn1_w, bn1_b = jnp.ones((planes,), jnp.float32), jnp.zeros((planes,), jnp.float32)
    bn2_w, bn2_b = jnp.ones((planes,), jnp.float32), jnp.zeros((planes,), jnp.float32)
    g_c1 = jax.random.normal(ks[3], conv1_w.shape, jnp.float32) * 0.01
    g_c2 = jax.random.normal(ks[4], conv2_w.shape, jnp.float32) * 0.01
    g_b1w = jax.random.normal(ks[5], (planes,), jnp.float32) * 0.01
    g_b1b = jax.random.normal(ks[6], (planes,), jnp.float32) * 0.01
    g_b2w = jax.random.normal(ks[7], (planes,), jnp.float32) * 0.01
    g_b2b = jax.random.normal(ks[8], (planes,), jnp.float32) * 0.01

    # running_mean / running_var are passed to F.batch_norm but with
    # training=True they never influence the output -> not needed here.
    params = {
        "conv1_w": conv1_w - coef * g_c1,
        "conv2_w": conv2_w - coef * g_c2,
        "bn1_w": bn1_w - coef * g_b1w,
        "bn1_b": bn1_b - coef * g_b1b,
        "bn2_w": bn2_w - coef * g_b2w,
        "bn2_b": bn2_b - coef * g_b2b,
    }

    # Small tm_max so the tiny test shapes still exercise multi-tile stats
    # accumulation + the tiled normalize pass (production default tm_max=512).
    fwd = jax.jit(functools.partial(f_basic_block_forward, stride=stride,
                                    in_planes=in_planes, planes=planes,
                                    tm_max=64))
    out = jax.block_until_ready(fwd(x, params))
    assert out.shape == (N, planes, H // stride, W // stride), out.shape

    ref = ref_forward(x, params, stride, in_planes, planes)
    err = float(jnp.max(jnp.abs(out - ref)))
    assert err < 5e-2, f"max abs error {err}"

    print("KERNEL_OK")
</pallas_src>

<mosaic_0001>
module attributes {stable_mosaic.version = 11 : i64} {
  func.func @conv_stats_kernel(%arg0: i32, %arg1: memref<64x128xbf16, #tpu.memory_space<vmem>>, %arg2: memref<128x128xbf16, #tpu.memory_space<vmem>>, %arg3: memref<64x128xf32, #tpu.memory_space<vmem>>, %arg4: memref<1x128xf32, #tpu.memory_space<vmem>>, %arg5: memref<1x128xf32, #tpu.memory_space<vmem>>) attributes {dimension_semantics = [#tpu.dimension_semantics<arbitrary>], iteration_bounds = array<i64: 2>, scalar_prefetch = 0 : i64, scratch_operands = 0 : i64, tpu.core_type = #tpu.core_type<tc>, window_params = [{transform_indices = @transform_0, window_bounds = array<i64: 64, 128>}, {pipeline_mode = #tpu.pipeline_mode<synchronous>, transform_indices = @transform_1, window_bounds = array<i64: 128, 128>}, {transform_indices = @transform_2, window_bounds = array<i64: 64, 128>}, {pipeline_mode = #tpu.pipeline_mode<synchronous>, transform_indices = @transform_3, window_bounds = array<i64: 1, 128>}, {pipeline_mode = #tpu.pipeline_mode<synchronous>, transform_indices = @transform_4, window_bounds = array<i64: 1, 128>}]} {
    %c0 = arith.constant 0 : index
    %c0_0 = arith.constant 0 : index
    %0 = vector.load %arg1[%c0, %c0_0] : memref<64x128xbf16, #tpu.memory_space<vmem>>, vector<64x128xbf16>
    %c0_1 = arith.constant 0 : index
    %c0_2 = arith.constant 0 : index
    %1 = vector.load %arg2[%c0_1, %c0_2] : memref<128x128xbf16, #tpu.memory_space<vmem>>, vector<128x128xbf16>
    %cst = arith.constant dense<0.000000e+00> : vector<64x128xf32>
    %2 = tpu.matmul %0, %1, %cst {dimension_numbers = #tpu.dot_dimension_numbers<[1], [0], [0], [1], [0, 0, 1, 1], [], []>} : vector<64x128xbf16>, vector<128x128xbf16>, vector<64x128xf32> -> vector<64x128xf32>
    %c0_3 = arith.constant 0 : index
    %c0_4 = arith.constant 0 : index
    %3 = vector.load %arg3[%c0_3, %c0_4] : memref<64x128xf32, #tpu.memory_space<vmem>>, vector<64x128xf32>
    tpu.vector_store %arg3[%c0_3, %c0_4], %2 {strides = array<i32>} : memref<64x128xf32, #tpu.memory_space<vmem>>, vector<64x128xf32>,
    %c0_i32 = arith.constant 0 : i32
    %4 = arith.cmpi eq, %arg0, %c0_i32 : i32
    %5 = arith.extui %4 : i1 to i32
    %c0_i32_5 = arith.constant 0 : i32
    %6 = arith.cmpi ne, %5, %c0_i32_5 : i32
    scf.if %6 {
      %cst_16 = arith.constant 0.000000e+00 : f32
      %18 = vector.broadcast %cst_16 : f32 to vector<1x128xf32>
      %c0_17 = arith.constant 0 : index
      %c0_18 = arith.constant 0 : index
      %19 = vector.load %arg4[%c0_17, %c0_18] : memref<1x128xf32, #tpu.memory_space<vmem>>, vector<1x128xf32>
      tpu.vector_store %arg4[%c0_17, %c0_18], %18 {strides = array<i32>} : memref<1x128xf32, #tpu.memory_space<vmem>>, vector<1x128xf32>,
      %cst_19 = arith.constant 0.000000e+00 : f32
      %20 = vector.broadcast %cst_19 : f32 to vector<1x128xf32>
      %c0_20 = arith.constant 0 : index
      %c0_21 = arith.constant 0 : index
      %21 = vector.load %arg5[%c0_20, %c0_21] : memref<1x128xf32, #tpu.memory_space<vmem>>, vector<1x128xf32>
      tpu.vector_store %arg5[%c0_20, %c0_21], %20 {strides = array<i32>} : memref<1x128xf32, #tpu.memory_space<vmem>>, vector<1x128xf32>,
    } else {
    }
    %c0_6 = arith.constant 0 : index
    %c0_7 = arith.constant 0 : index
    %7 = vector.load %arg4[%c0_6, %c0_7] : memref<1x128xf32, #tpu.memory_space<vmem>>, vector<1x128xf32>
    %cst_8 = arith.constant dense<0.000000e+00> : vector<128xf32>
    %8 = vector.multi_reduction <add>, %2, %cst_8 [0] : vector<64x128xf32> to vector<128xf32>
    %9 = vector.shape_cast %8 : vector<128xf32> to vector<1x128xf32>
    %10 = arith.addf %7, %9 : vector<1x128xf32>
    %c0_9 = arith.constant 0 : index
    %c0_10 = arith.constant 0 : index
    %11 = vector.load %arg4[%c0_9, %c0_10] : memref<1x128xf32, #tpu.memory_space<vmem>>, vector<1x128xf32>
    tpu.vector_store %arg4[%c0_9, %c0_10], %10 {strides = array<i32>} : memref<1x128xf32, #tpu.memory_space<vmem>>, vector<1x128xf32>,
    %c0_11 = arith.constant 0 : index
    %c0_12 = arith.constant 0 : index
    %12 = vector.load %arg5[%c0_11, %c0_12] : memref<1x128xf32, #tpu.memory_space<vmem>>, vector<1x128xf32>
    %13 = arith.mulf %2, %2 : vector<64x128xf32>
    %cst_13 = arith.constant dense<0.000000e+00> : vector<128xf32>
    %14 = vector.multi_reduction <add>, %13, %cst_13 [0] : vector<64x128xf32> to vector<128xf32>
    %15 = vector.shape_cast %14 : vector<128xf32> to vector<1x128xf32>
    %16 = arith.addf %12, %15 : vector<1x128xf32>
    %c0_14 = arith.constant 0 : index
    %c0_15 = arith.constant 0 : index
    %17 = vector.load %arg5[%c0_14, %c0_15] : memref<1x128xf32, #tpu.memory_space<vmem>>, vector<1x128xf32>
    tpu.vector_store %arg5[%c0_14, %c0_15], %16 {strides = array<i32>} : memref<1x128xf32, #tpu.memory_space<vmem>>, vector<1x128xf32>,
    return
  }
  func.func @transform_0(%arg0: i32) -> (i32, i32) {
    %c0_i32 = arith.constant 0 : i32
    %c0_i32_0 = arith.constant 0 : i32
    return %arg0, %c0_i32 : i32, i32
  }
  func.func @transform_1(%arg0: i32) -> (i32, i32) {
    %c0_i32 = arith.constant 0 : i32
    %c0_i32_0 = arith.constant 0 : i32
    %c0_i32_1 = arith.constant 0 : i32
    return %c0_i32, %c0_i32_0 : i32, i32
  }
  func.func @transform_2(%arg0: i32) -> (i32, i32) {
    %c0_i32 = arith.constant 0 : i32
    %c0_i32_0 = arith.constant 0 : i32
    return %arg0, %c0_i32 : i32, i32
  }
  func.func @transform_3(%arg0: i32) -> (i32, i32) {
    %c0_i32 = arith.constant 0 : i32
    %c0_i32_0 = arith.constant 0 : i32
    %c0_i32_1 = arith.constant 0 : i32
    return %c0_i32, %c0_i32_0 : i32, i32
  }
  func.func @transform_4(%arg0: i32) -> (i32, i32) {
    %c0_i32 = arith.constant 0 : i32
    %c0_i32_0 = arith.constant 0 : i32
    %c0_i32_1 = arith.constant 0 : i32
    return %c0_i32, %c0_i32_0 : i32, i32
  }
}

module attributes {stable_mosaic.version = 11 : i64} {
  func.func @bn_relu_kernel(%arg0: i32, %arg1: memref<64x128xf32, #tpu.memory_space<vmem>>, %arg2: memref<1x128xf32, #tpu.memory_space<vmem>>, %arg3: memref<1x128xf32, #tpu.memory_space<vmem>>, %arg4: memref<64x128xbf16, #tpu.memory_space<vmem>>) attributes {dimension_semantics = [#tpu.dimension_semantics<parallel>], iteration_bounds = array<i64: 2>, scalar_prefetch = 0 : i64, scratch_operands = 0 : i64, tpu.core_type = #tpu.core_type<tc>, window_params = [{transform_indices = @transform_0, window_bounds = array<i64: 64, 128>}, {pipeline_mode = #tpu.pipeline_mode<synchronous>, transform_indices = @transform_1, window_bounds = array<i64: 1, 128>}, {pipeline_mode = #tpu.pipeline_mode<synchronous>, transform_indices = @transform_2, window_bounds = array<i64: 1, 128>}, {transform_indices = @transform_3, window_bounds = array<i64: 64, 128>}]} {
    %c0 = arith.constant 0 : index
    %c0_0 = arith.constant 0 : index
    %0 = vector.load %arg1[%c0, %c0_0] : memref<64x128xf32, #tpu.memory_space<vmem>>, vector<64x128xf32>
    %c0_1 = arith.constant 0 : index
    %c0_2 = arith.constant 0 : index
    %1 = vector.load %arg2[%c0_1, %c0_2] : memref<1x128xf32, #tpu.memory_space<vmem>>, vector<1x128xf32>
    %2 = vector.broadcast %1 : vector<1x128xf32> to vector<64x128xf32>
    %3 = arith.mulf %0, %2 : vector<64x128xf32>
    %c0_3 = arith.constant 0 : index
    %c0_4 = arith.constant 0 : index
    %4 = vector.load %arg3[%c0_3, %c0_4] : memref<1x128xf32, #tpu.memory_space<vmem>>, vector<1x128xf32>
    %5 = vector.broadcast %4 : vector<1x128xf32> to vector<64x128xf32>
    %6 = arith.addf %3, %5 : vector<64x128xf32>
    %cst = arith.constant 0.000000e+00 : f32
    %7 = vector.broadcast %cst : f32 to vector<64x128xf32>
    %8 = arith.maximumf %6, %7 : vector<64x128xf32>
    %9 = arith.truncf %8 : vector<64x128xf32> to vector<64x128xbf16>
    %c0_5 = arith.constant 0 : index
    %c0_6 = arith.constant 0 : index
    %10 = vector.load %arg4[%c0_5, %c0_6] : memref<64x128xbf16, #tpu.memory_space<vmem>>, vector<64x128xbf16>
    tpu.vector_store %arg4[%c0_5, %c0_6], %9 {strides = array<i32>} : memref<64x128xbf16, #tpu.memory_space<vmem>>, vector<64x128xbf16>,
    return
  }
  func.func @transform_0(%arg0: i32) -> (i32, i32) {
    %c0_i32 = arith.constant 0 : i32
    %c0_i32_0 = arith.constant 0 : i32
    return %arg0, %c0_i32 : i32, i32
  }
  func.func @transform_1(%arg0: i32) -> (i32, i32) {
    %c0_i32 = arith.constant 0 : i32
    %c0_i32_0 = arith.constant 0 : i32
    %c0_i32_1 = arith.constant 0 : i32
    return %c0_i32, %c0_i32_0 : i32, i32
  }
  func.func @transform_2(%arg0: i32) -> (i32, i32) {
    %c0_i32 = arith.constant 0 : i32
    %c0_i32_0 = arith.constant 0 : i32
    %c0_i32_1 = arith.constant 0 : i32
    return %c0_i32, %c0_i32_0 : i32, i32
  }
  func.func @transform_3(%arg0: i32) -> (i32, i32) {
    %c0_i32 = arith.constant 0 : i32
    %c0_i32_0 = arith.constant 0 : i32
    return %arg0, %c0_i32 : i32, i32
  }
}

module attributes {stable_mosaic.version = 11 : i64} {
  func.func @bn_add_relu_kernel(%arg0: i32, %arg1: memref<64x128xf32, #tpu.memory_space<vmem>>, %arg2: memref<1x128xf32, #tpu.memory_space<vmem>>, %arg3: memref<1x128xf32, #tpu.memory_space<vmem>>, %arg4: memref<64x128xf32, #tpu.memory_space<vmem>>, %arg5: memref<64x128xf32, #tpu.memory_space<vmem>>) attributes {dimension_semantics = [#tpu.dimension_semantics<parallel>], iteration_bounds = array<i64: 2>, scalar_prefetch = 0 : i64, scratch_operands = 0 : i64, tpu.core_type = #tpu.core_type<tc>, window_params = [{transform_indices = @transform_0, window_bounds = array<i64: 64, 128>}, {pipeline_mode = #tpu.pipeline_mode<synchronous>, transform_indices = @transform_1, window_bounds = array<i64: 1, 128>}, {pipeline_mode = #tpu.pipeline_mode<synchronous>, transform_indices = @transform_2, window_bounds = array<i64: 1, 128>}, {transform_indices = @transform_3, window_bounds = array<i64: 64, 128>}, {transform_indices = @transform_4, window_bounds = array<i64: 64, 128>}]} {
    %c0 = arith.constant 0 : index
    %c0_0 = arith.constant 0 : index
    %0 = vector.load %arg1[%c0, %c0_0] : memref<64x128xf32, #tpu.memory_space<vmem>>, vector<64x128xf32>
    %c0_1 = arith.constant 0 : index
    %c0_2 = arith.constant 0 : index
    %1 = vector.load %arg2[%c0_1, %c0_2] : memref<1x128xf32, #tpu.memory_space<vmem>>, vector<1x128xf32>
    %2 = vector.broadcast %1 : vector<1x128xf32> to vector<64x128xf32>
    %3 = arith.mulf %0, %2 : vector<64x128xf32>
    %c0_3 = arith.constant 0 : index
    %c0_4 = arith.constant 0 : index
    %4 = vector.load %arg3[%c0_3, %c0_4] : memref<1x128xf32, #tpu.memory_space<vmem>>, vector<1x128xf32>
    %5 = vector.broadcast %4 : vector<1x128xf32> to vector<64x128xf32>
    %6 = arith.addf %3, %5 : vector<64x128xf32>
    %c0_5 = arith.constant 0 : index
    %c0_6 = arith.constant 0 : index
    %7 = vector.load %arg4[%c0_5, %c0_6] : memref<64x128xf32, #tpu.memory_space<vmem>>, vector<64x128xf32>
    %8 = arith.addf %6, %7 : vector<64x128xf32>
    %cst = arith.constant 0.000000e+00 : f32
    %9 = vector.broadcast %cst : f32 to vector<64x128xf32>
    %10 = arith.maximumf %8, %9 : vector<64x128xf32>
    %c0_7 = arith.constant 0 : index
    %c0_8 = arith.constant 0 : index
    %11 = vector.load %arg5[%c0_7, %c0_8] : memref<64x128xf32, #tpu.memory_space<vmem>>, vector<64x128xf32>
    tpu.vector_store %arg5[%c0_7, %c0_8], %10 {strides = array<i32>} : memref<64x128xf32, #tpu.memory_space<vmem>>, vector<64x128xf32>,
    return
  }
  func.func @transform_0(%arg0: i32) -> (i32, i32) {
    %c0_i32 = arith.constant 0 : i32
    %c0_i32_0 = arith.constant 0 : i32
    return %arg0, %c0_i32 : i32, i32
  }
  func.func @transform_1(%arg0: i32) -> (i32, i32) {
    %c0_i32 = arith.constant 0 : i32
    %c0_i32_0 = arith.constant 0 : i32
    %c0_i32_1 = arith.constant 0 : i32
    return %c0_i32, %c0_i32_0 : i32, i32
  }
  func.func @transform_2(%arg0: i32) -> (i32, i32) {
    %c0_i32 = arith.constant 0 : i32
    %c0_i32_0 = arith.constant 0 : i32
    %c0_i32_1 = arith.constant 0 : i32
    return %c0_i32, %c0_i32_0 : i32, i32
  }
  func.func @transform_3(%arg0: i32) -> (i32, i32) {
    %c0_i32 = arith.constant 0 : i32
    %c0_i32_0 = arith.constant 0 : i32
    return %arg0, %c0_i32 : i32, i32
  }
  func.func @transform_4(%arg0: i32) -> (i32, i32) {
    %c0_i32 = arith.constant 0 : i32
    %c0_i32_0 = arith.constant 0 : i32
    return %arg0, %c0_i32 : i32, i32
  }
}

</mosaic_0001>

<llo_original>
// kernel: f_basic_block_forward.5
$region0: #{f_basic_block_forward.5}
  #allocation0 [shape = 'u32[]', space=smem, size = 0x4, offset = 0x4, fixed_abs, tag = 'smem constant byte address 0x4 - core index']
  #allocation1 [shape = 'u32[72,128]{1,0:T(1,128)}', space=vmem, size = 0x9000, scoped, tag = 'internal scratch']
  %s0 = inlined_call_operand.vmem [shape: f32[128,128], index: 0, kind: input, shape index: {}]
  %s1 = inlined_call_operand.vmem [shape: f32[1,128], index: 1, kind: input, shape index: {}]
  %s2 = inlined_call_operand.vmem [shape: f32[1,128], index: 2, kind: input, shape index: {}]
  %s3 = inlined_call_operand.vmem [shape: bf16[128,128], index: 3, kind: output, shape index: {}]
  %s4 = sld [smem:[#allocation0]]
  $region45: #{f_basic_block_forward.5} parent=0
    _
  %s6 = ssub.s32 1, %s4
  %s7 = scalar_select 0, %s6, %s4
  loop: start=0, step=1, limit=4
  $region2: #{f_basic_block_forward.5} parent=0 // loop_pre_header
    _
  $region3: #{f_basic_block_forward.5} parent=0 // loop_header
    %s9 = sphi 0, %s13
    %p10 = scmp.ge.s32.totalorder %s9, 4
    %s19 = sphi 0, %s21
    %s22 = sphi 0, %s19
    %s23 = sphi 0, %s22
    %s39 = sphi 0, %s23
    %s43 = sphi 0, %s43
    %s45 = sphi 0, %s43
    %s46 = sphi 0, %s45
    %s60 = sphi 0, %s46
    %s64 = sphi 0, %s64
    %s66 = sphi 0, %s64
    %s67 = sphi 0, %s66
    %s81 = sphi 0, %s67
    %s87 = sphi 0, %s89
    %s90 = sphi 0, %s87
    %s91 = sphi 0, %s90
    %s107 = sphi 0, %s91
  $region4: #{f_basic_block_forward.5} parent=0 // loop_header_branch
    %12 = sbr.rel (%p10) target = $region8
  $region5: #{f_basic_block_forward.5} parent=0 // loop_body
    %s14 = ssub.s32 %s9, 1
    %s15 = ssub.s32 %s9, 2
    %s16 = sadd.s32 %s9, 1
    %s17 = ssub.s32 %s9, %s16
    %p18 = scmp.eq.s32.totalorder %s17, 0
    %s20 = sadd.s32 %s19, 1
    %s21 = scalar_select %p18, %s19, %s20
    %p24 = pneg %p18
    %p25 = scmp.eq.s32.totalorder %s9, 1
    %p26 = por %p24, %p25
    %p27 = scmp.ne.s32.totalorder %s19, %s22
    %p28 = scmp.eq.s32.totalorder %s9, 0
    %p29 = por %p27, %p28
    %p30 = scmp.ne.s32.totalorder %s19, %s22
    %p31 = scmp.eq.s32.totalorder %s14, 1
    %p32 = por %p30, %p31
    %p33 = scmp.ne.s32.totalorder %s22, %s23
    %p34 = scmp.eq.s32.totalorder %s14, 0
    %p35 = por %p33, %p34
    %p36 = scmp.ne.s32.totalorder %s22, %s23
    %p37 = scmp.eq.s32.totalorder %s15, 1
    %p38 = por %p36, %p37
    %p40 = scmp.ne.s32.totalorder %s23, %s39
    %p41 = scmp.eq.s32.totalorder %s15, 0
    %p42 = por %p40, %p41
    %s44 = sadd.s32 %s43, 1
    %p47 = scmp.eq.s32.totalorder %s9, 1
    %p48 = scmp.ne.s32.totalorder %s43, %s45
    %p49 = scmp.eq.s32.totalorder %s9, 0
    %p50 = por %p48, %p49
    %p51 = scmp.ne.s32.totalorder %s43, %s45
    %p52 = scmp.eq.s32.totalorder %s14, 1
    %p53 = por %p51, %p52
    %p54 = scmp.ne.s32.totalorder %s45, %s46
    %p55 = scmp.eq.s32.totalorder %s14, 0
    %p56 = por %p54, %p55
    %p57 = scmp.ne.s32.totalorder %s45, %s46
    %p58 = scmp.eq.s32.totalorder %s15, 1
    %p59 = por %p57, %p58
    %p61 = scmp.ne.s32.totalorder %s46, %s60
    %p62 = scmp.eq.s32.totalorder %s15, 0
    %p63 = por %p61, %p62
    %s65 = sadd.s32 %s64, 1
    %p68 = scmp.eq.s32.totalorder %s9, 1
    %p69 = scmp.ne.s32.totalorder %s64, %s66
    %p70 = scmp.eq.s32.totalorder %s9, 0
    %p71 = por %p69, %p70
    %p72 = scmp.ne.s32.totalorder %s64, %s66
    %p73 = scmp.eq.s32.totalorder %s14, 1
    %p74 = por %p72, %p73
    %p75 = scmp.ne.s32.totalorder %s66, %s67
    %p76 = scmp.eq.s32.totalorder %s14, 0
    %p77 = por %p75, %p76
    %p78 = scmp.ne.s32.totalorder %s66, %s67
    %p79 = scmp.eq.s32.totalorder %s15, 1
    %p80 = por %p78, %p79
    %p82 = scmp.ne.s32.totalorder %s67, %s81
    %p83 = scmp.eq.s32.totalorder %s15, 0
    %p84 = por %p82, %p83
    %s85 = ssub.s32 %s9, %s16
    %p86 = scmp.eq.s32.totalorder %s85, 0
    %s88 = sadd.s32 %s87, 1
    %s89 = scalar_select %p86, %s87, %s88
    %p92 = pneg %p86
    %p93 = scmp.eq.s32.totalorder %s9, 1
    %p94 = por %p92, %p93
    %p95 = scmp.ne.s32.totalorder %s87, %s90
    %p96 = scmp.eq.s32.totalorder %s9, 0
    %p97 = por %p95, %p96
    %p98 = scmp.ne.s32.totalorder %s87, %s90
    %p99 = scmp.eq.s32.totalorder %s14, 1
    %p100 = por %p98, %p99
    %p101 = scmp.ne.s32.totalorder %s90, %s91
    %p102 = scmp.eq.s32.totalorder %s14, 0
    %p103 = por %p101, %p102
    %p104 = scmp.ne.s32.totalorder %s90, %s91
    %p105 = scmp.eq.s32.totalorder %s15, 1
    %p106 = por %p104, %p105
    %p108 = scmp.ne.s32.totalorder %s91, %s107
    %p109 = scmp.eq.s32.totalorder %s15, 0
    %p110 = por %p108, %p109
    %p111 = scmp.le.s32.totalorder 1, %s9
    %p112 = scmp.lt.s32.totalorder %s9, 3
    %p113 = pnand %p111, %p112
    %p114 = pneg %p113
    // Predicated region
    $region9: #{f_basic_block_forward.5} parent=5 // pred_check
      _
    $region10: #{f_basic_block_forward.5} parent=5 // pred_check_branch
      %116 = sbr.rel (%p113) target = $region12
    $region11: #{f_basic_block_forward.5} parent=5 // pred_region
      %s117 = ssub.s32 %s9, 1
      // Predicated region
      $region13: #{f_basic_block_forward.5} parent=11 // pred_check
        %p118 = pneg %p56
      $region14: #{f_basic_block_forward.5} parent=11 // pred_check_branch
        %120 = sbr.rel (%p118) target = $region16
      $region15: #{f_basic_block_forward.5} parent=11 // pred_region
        _
      $region16: #{f_basic_block_forward.5} parent=11 // pred_fallthru
        _
      // Predicated region
      $region17: #{f_basic_block_forward.5} parent=11 // pred_check
        %p121 = pneg %p77
      $region18: #{f_basic_block_forward.5} parent=11 // pred_check_branch
        %123 = sbr.rel (%p121) target = $region20
      $region19: #{f_basic_block_forward.5} parent=11 // pred_region
        _
      $region20: #{f_basic_block_forward.5} parent=11 // pred_fallthru
        _
    $region12: #{f_basic_block_forward.5} parent=5 // pred_fallthru
      _
    %p124 = scmp.lt.s32.totalorder %s9, 2
    // Predicated region
    $region21: #{f_basic_block_forward.5} parent=5 // pred_check
      %p125 = pneg %p124
    $region22: #{f_basic_block_forward.5} parent=5 // pred_check_branch
      %127 = sbr.rel (%p125) target = $region24
    $region23: #{f_basic_block_forward.5} parent=5 // pred_region
      // Predicated region
      $region25: #{f_basic_block_forward.5} parent=23 // pred_check
        %p128 = pneg %p29
      $region26: #{f_basic_block_forward.5} parent=23 // pred_check_branch
        %130 = sbr.rel (%p128) target = $region28
      $region27: #{f_basic_block_forward.5} parent=23 // pred_region
        %s131 = smul.u32 8, %s9
        %p132 = scmp.lt.s32.totalorder %s131, 15
        %s133 = scalar_select %p132, %s131, 15
        %s134 = smul.addr %s133, 8
        %s135 = scalar_lea.vmem %s0, %s134
        %s136 = smul.u32 8, %s9
      $region28: #{f_basic_block_forward.5} parent=23 // pred_fallthru
        _
    $region24: #{f_basic_block_forward.5} parent=5 // pred_fallthru
      _
    %p137 = scmp.le.s32.totalorder 1, %s9
    %p138 = scmp.lt.s32.totalorder %s9, 3
    %p139 = pnand %p137, %p138
    %p140 = pneg %p139
    // Predicated region
    $region29: #{f_basic_block_forward.5} parent=5 // pred_check
      _
    $region30: #{f_basic_block_forward.5} parent=5 // pred_check_branch
      %142 = sbr.rel (%p139) target = $region32
    $region31: #{f_basic_block_forward.5} parent=5 // pred_region
      %s143 = ssub.s32 %s9, 1
      %s144 = smul.u32 8, %s14
      %p145 = scmp.lt.s32.totalorder %s144, 15
      %s146 = scalar_select %p145, %s144, 15
      %s147 = smul.addr %s146, 8
      %s148 = scalar_lea.vmem %s0, %s147
      %p149 = pneg %p35
      %p150 = pneg %p32
      %p151 = pneg %p56
      %p152 = pneg %p53
      %p153 = pneg %p77
      %p154 = pneg %p74
      %p155 = pneg %p103
      %p156 = pneg %p100
      %s157 = smul.u32 8, %s14
      %p158 = scmp.lt.s32.totalorder %s157, 15
      %s159 = scalar_select %p158, %s157, 15
      %s160 = smul.addr %s159, 4
      %s161 = scalar_lea.vmem %s3, %s160
      %s162 = smul.u32 8, %s14
      %p163 = scmp.lt.s32.totalorder %s162, 15
      %s164 = scalar_select %p163, %s162, 15
      %s165 = smul.addr %s164, 8
      %s166 = scalar_lea.vmem %s0, %s165
      %s167 = smul.u32 8, %s14
      %s168 = smul.u32 8, %s14
      %p169 = scmp.lt.s32.totalorder %s168, 15
      %s170 = scalar_select %p169, %s168, 15
      %s171 = smul.addr %s170, 4
      %s172 = scalar_lea.vmem %s3, %s171
      %s173 = smul.u32 8, %s14
      %v174 = vld [vmem:[%s166] sm:$0xff]
      %v175 = vld [vmem:[%s166 + $0x8] sm:$0xff]
      %v176 = vld [vmem:[%s166 + $0x10] sm:$0xff]
      %v177 = vld [vmem:[%s166 + $0x18] sm:$0xff]
      %v178 = vld [vmem:[%s166 + $0x20] sm:$0xff]
      %v179 = vld [vmem:[%s166 + $0x28] sm:$0xff]
      %v180 = vld [vmem:[%s166 + $0x30] sm:$0xff]
      %v181 = vld [vmem:[%s166 + $0x38] sm:$0xff]
      %v182 = vld [vmem:[%s1] sm:$0x1]
      %v184 = vperm.slane %v182, 0
      %v186 = vmul.f32 %v174, %v184
      %v187 = vmul.f32 %v175, %v184
      %v188 = vmul.f32 %v176, %v184
      %v189 = vmul.f32 %v177, %v184
      %v190 = vmul.f32 %v178, %v184
      %v191 = vmul.f32 %v179, %v184
      %v192 = vmul.f32 %v180, %v184
      %v193 = vmul.f32 %v181, %v184
      %v194 = vld [vmem:[%s2] sm:$0x1]
      %v196 = vperm.slane %v194, 0
      %v198 = vadd.f32 %v186, %v196
      %v199 = vadd.f32 %v187, %v196
      %v200 = vadd.f32 %v188, %v196
      %v201 = vadd.f32 %v189, %v196
      %v202 = vadd.f32 %v190, %v196
      %v203 = vadd.f32 %v191, %v196
      %v204 = vadd.f32 %v192, %v196
      %v205 = vadd.f32 %v193, %v196
      %v206 = vmax.f32 %v198, 0.0
      %v207 = vmax.f32 %v199, 0.0
      %v208 = vmax.f32 %v200, 0.0
      %v209 = vmax.f32 %v201, 0.0
      %v210 = vmax.f32 %v202, 0.0
      %v211 = vmax.f32 %v203, 0.0
      %v212 = vmax.f32 %v204, 0.0
      %v213 = vmax.f32 %v205, 0.0
      %v214 = vpack.c.bf16 %v206, %v206
      %v215 = vpack.c.bf16 %v207, %v207
      %v216 = vpack.c.bf16 %v208, %v208
      %v217 = vpack.c.bf16 %v209, %v209
      %v218 = vpack.c.bf16 %v210, %v210
      %v219 = vpack.c.bf16 %v211, %v211
      %v220 = vpack.c.bf16 %v212, %v212
      %v221 = vpack.c.bf16 %v213, %v213
      %222 = vst [vmem:[%s172] sm:$0xf] %v214
      %223 = vst [vmem:[%s172 + $0x4] sm:$0xf] %v215
      %224 = vst [vmem:[%s172 + $0x8] sm:$0xf] %v216
      %225 = vst [vmem:[%s172 + $0xc] sm:$0xf] %v217
      %226 = vst [vmem:[%s172 + $0x10] sm:$0xf] %v218
      %227 = vst [vmem:[%s172 + $0x14] sm:$0xf] %v219
      %228 = vst [vmem:[%s172 + $0x18] sm:$0xf] %v220
      %229 = vst [vmem:[%s172 + $0x1c] sm:$0xf] %v221
      %s230 = smul.u32 8, %s14
      %p231 = scmp.lt.s32.totalorder %s230, 15
      %s232 = scalar_select %p231, %s230, 15
      %s233 = smul.addr %s232, 4
      %s234 = scalar_lea.vmem %s3, %s233
      // Predicated region
      $region33: #{f_basic_block_forward.5} parent=31 // pred_check
        %p235 = pneg %p100
      $region34: #{f_basic_block_forward.5} parent=31 // pred_check_branch
        %237 = sbr.rel (%p235) target = $region36
      $region35: #{f_basic_block_forward.5} parent=31 // pred_region
        %s238 = smul.u32 8, %s14
      $region36: #{f_basic_block_forward.5} parent=31 // pred_fallthru
        _
    $region32: #{f_basic_block_forward.5} parent=5 // pred_fallthru
      _
    %p239 = scmp.le.s32.totalorder 2, %s9
    // Predicated region
    $region37: #{f_basic_block_forward.5} parent=5 // pred_check
      %p240 = pneg %p239
    $region38: #{f_basic_block_forward.5} parent=5 // pred_check_branch
      %242 = sbr.rel (%p240) target = $region40
    $region39: #{f_basic_block_forward.5} parent=5 // pred_region
      %s243 = ssub.s32 %s9, 2
      // Predicated region
      $region41: #{f_basic_block_forward.5} parent=39 // pred_check
        %p244 = pneg %p106
      $region42: #{f_basic_block_forward.5} parent=39 // pred_check_branch
        %246 = sbr.rel (%p244) target = $region44
      $region43: #{f_basic_block_forward.5} parent=39 // pred_region
        %s247 = smul.u32 8, %s15
        %p248 = scmp.lt.s32.totalorder %s247, 15
        %s249 = scalar_select %p248, %s247, 15
        %s250 = smul.addr %s249, 4
        %s251 = scalar_lea.vmem %s3, %s250
      $region44: #{f_basic_block_forward.5} parent=39 // pred_fallthru
        _
    $region40: #{f_basic_block_forward.5} parent=5 // pred_fallthru
      _
  $region6: #{f_basic_block_forward.5} parent=0 // loop_footer
    %s13 = sadd.s32 1, %s9
  $region7: #{f_basic_block_forward.5} parent=0 // loop_footer_branch
    %8 = sbr.rel target = $region3
  $region8: #{f_basic_block_forward.5} parent=0 // loop_exit
    _

// kernel: f_basic_block_forward.4
$region0: #{f_basic_block_forward.4}
  #allocation0 [shape = 'u32[]', space=smem, size = 0x4, offset = 0x4, fixed_abs, tag = 'smem constant byte address 0x4 - core index']
  #allocation1 [shape = 'u32[72,128]{1,0:T(1,128)}', space=vmem, size = 0x9000, scoped, tag = 'internal scratch']
  %s0 = inlined_call_operand.vmem [shape: bf16[128,128], index: 0, kind: input, shape index: {}]
  %s1 = inlined_call_operand.vmem [shape: bf16[128,128], index: 1, kind: input, shape index: {}]
  %s2 = inlined_call_operand.vmem [shape: f32[128,128], index: 2, kind: output, shape index: {0}]
  %s3 = inlined_call_operand.vmem [shape: f32[1,128], index: 3, kind: output, shape index: {1}]
  %s4 = inlined_call_operand.vmem [shape: f32[1,128], index: 4, kind: output, shape index: {2}]
  %5 = xla_tuple %s2, %s3, %s4
  %s6 = sld [smem:[#allocation0]]
  $region61: #{f_basic_block_forward.4} parent=0
    _
  %s8 = ssub.s32 1, %s6
  %s9 = scalar_select 0, %s8, %s6
  loop: start=0, step=1, limit=4
  $region2: #{f_basic_block_forward.4} parent=0 // loop_pre_header
    _
  $region3: #{f_basic_block_forward.4} parent=0 // loop_header
    %s11 = sphi 0, %s15
    %p12 = scmp.ge.s32.totalorder %s11, 4
    %s21 = sphi 0, %s23
    %s24 = sphi 0, %s21
    %s25 = sphi 0, %s24
    %s41 = sphi 0, %s25
    %s45 = sphi 0, %s45
    %s47 = sphi 0, %s45
    %s48 = sphi 0, %s47
    %s62 = sphi 0, %s48
    %s68 = sphi 0, %s70
    %s71 = sphi 0, %s68
    %s72 = sphi 0, %s71
    %s88 = sphi 0, %s72
    %s92 = sphi 0, %s92
    %s94 = sphi 0, %s92
    %s95 = sphi 0, %s94
    %s109 = sphi 0, %s95
    %s113 = sphi 0, %s113
    %s115 = sphi 0, %s113
    %s116 = sphi 0, %s115
    %s130 = sphi 0, %s116
  $region4: #{f_basic_block_forward.4} parent=0 // loop_header_branch
    %14 = sbr.rel (%p12) target = $region8
  $region5: #{f_basic_block_forward.4} parent=0 // loop_body
    %s16 = ssub.s32 %s11, 1
    %s17 = ssub.s32 %s11, 2
    %s18 = sadd.s32 %s11, 1
    %s19 = ssub.s32 %s11, %s18
    %p20 = scmp.eq.s32.totalorder %s19, 0
    %s22 = sadd.s32 %s21, 1
    %s23 = scalar_select %p20, %s21, %s22
    %p26 = pneg %p20
    %p27 = scmp.eq.s32.totalorder %s11, 1
    %p28 = por %p26, %p27
    %p29 = scmp.ne.s32.totalorder %s21, %s24
    %p30 = scmp.eq.s32.totalorder %s11, 0
    %p31 = por %p29, %p30
    %p32 = scmp.ne.s32.totalorder %s21, %s24
    %p33 = scmp.eq.s32.totalorder %s16, 1
    %p34 = por %p32, %p33
    %p35 = scmp.ne.s32.totalorder %s24, %s25
    %p36 = scmp.eq.s32.totalorder %s16, 0
    %p37 = por %p35, %p36
    %p38 = scmp.ne.s32.totalorder %s24, %s25
    %p39 = scmp.eq.s32.totalorder %s17, 1
    %p40 = por %p38, %p39
    %p42 = scmp.ne.s32.totalorder %s25, %s41
    %p43 = scmp.eq.s32.totalorder %s17, 0
    %p44 = por %p42, %p43
    %s46 = sadd.s32 %s45, 1
    %p49 = scmp.eq.s32.totalorder %s11, 1
    %p50 = scmp.ne.s32.totalorder %s45, %s47
    %p51 = scmp.eq.s32.totalorder %s11, 0
    %p52 = por %p50, %p51
    %p53 = scmp.ne.s32.totalorder %s45, %s47
    %p54 = scmp.eq.s32.totalorder %s16, 1
    %p55 = por %p53, %p54
    %p56 = scmp.ne.s32.totalorder %s47, %s48
    %p57 = scmp.eq.s32.totalorder %s16, 0
    %p58 = por %p56, %p57
    %p59 = scmp.ne.s32.totalorder %s47, %s48
    %p60 = scmp.eq.s32.totalorder %s17, 1
    %p61 = por %p59, %p60
    %p63 = scmp.ne.s32.totalorder %s48, %s62
    %p64 = scmp.eq.s32.totalorder %s17, 0
    %p65 = por %p63, %p64
    %s66 = ssub.s32 %s11, %s18
    %p67 = scmp.eq.s32.totalorder %s66, 0
    %s69 = sadd.s32 %s68, 1
    %s70 = scalar_select %p67, %s68, %s69
    %p73 = pneg %p67
    %p74 = scmp.eq.s32.totalorder %s11, 1
    %p75 = por %p73, %p74
    %p76 = scmp.ne.s32.totalorder %s68, %s71
    %p77 = scmp.eq.s32.totalorder %s11, 0
    %p78 = por %p76, %p77
    %p79 = scmp.ne.s32.totalorder %s68, %s71
    %p80 = scmp.eq.s32.totalorder %s16, 1
    %p81 = por %p79, %p80
    %p82 = scmp.ne.s32.totalorder %s71, %s72
    %p83 = scmp.eq.s32.totalorder %s16, 0
    %p84 = por %p82, %p83
    %p85 = scmp.ne.s32.totalorder %s71, %s72
    %p86 = scmp.eq.s32.totalorder %s17, 1
    %p87 = por %p85, %p86
    %p89 = scmp.ne.s32.totalorder %s72, %s88
    %p90 = scmp.eq.s32.totalorder %s17, 0
    %p91 = por %p89, %p90
    %s93 = sadd.s32 %s92, 1
    %p96 = scmp.eq.s32.totalorder %s11, 1
    %p97 = scmp.ne.s32.totalorder %s92, %s94
    %p98 = scmp.eq.s32.totalorder %s11, 0
    %p99 = por %p97, %p98
    %p100 = scmp.ne.s32.totalorder %s92, %s94
    %p101 = scmp.eq.s32.totalorder %s16, 1
    %p102 = por %p100, %p101
    %p103 = scmp.ne.s32.totalorder %s94, %s95
    %p104 = scmp.eq.s32.totalorder %s16, 0
    %p105 = por %p103, %p104
    %p106 = scmp.ne.s32.totalorder %s94, %s95
    %p107 = scmp.eq.s32.totalorder %s17, 1
    %p108 = por %p106, %p107
    %p110 = scmp.ne.s32.totalorder %s95, %s109
    %p111 = scmp.eq.s32.totalorder %s17, 0
    %p112 = por %p110, %p111
    %s114 = sadd.s32 %s113, 1
    %p117 = scmp.eq.s32.totalorder %s11, 1
    %p118 = scmp.ne.s32.totalorder %s113, %s115
    %p119 = scmp.eq.s32.totalorder %s11, 0
    %p120 = por %p118, %p119
    %p121 = scmp.ne.s32.totalorder %s113, %s115
    %p122 = scmp.eq.s32.totalorder %s16, 1
    %p123 = por %p121, %p122
    %p124 = scmp.ne.s32.totalorder %s115, %s116
    %p125 = scmp.eq.s32.totalorder %s16, 0
    %p126 = por %p124, %p125
    %p127 = scmp.ne.s32.totalorder %s115, %s116
    %p128 = scmp.eq.s32.totalorder %s17, 1
    %p129 = por %p127, %p128
    %p131 = scmp.ne.s32.totalorder %s116, %s130
    %p132 = scmp.eq.s32.totalorder %s17, 0
    %p133 = por %p131, %p132
    %p134 = scmp.le.s32.totalorder 1, %s11
    %p135 = scmp.lt.s32.totalorder %s11, 3
    %p136 = pnand %p134, %p135
    %p137 = pneg %p136
    // Predicated region
    $region9: #{f_basic_block_forward.4} parent=5 // pred_check
      _
    $region10: #{f_basic_block_forward.4} parent=5 // pred_check_branch
      %139 = sbr.rel (%p136) target = $region12
    $region11: #{f_basic_block_forward.4} parent=5 // pred_region
      %s140 = ssub.s32 %s11, 1
      // Predicated region
      $region13: #{f_basic_block_forward.4} parent=11 // pred_check
        %p141 = pneg %p58
      $region14: #{f_basic_block_forward.4} parent=11 // pred_check_branch
        %143 = sbr.rel (%p141) target = $region16
      $region15: #{f_basic_block_forward.4} parent=11 // pred_region
        _
      $region16: #{f_basic_block_forward.4} parent=11 // pred_fallthru
        _
    $region12: #{f_basic_block_forward.4} parent=5 // pred_fallthru
      _
    %p144 = scmp.lt.s32.totalorder %s11, 2
    // Predicated region
    $region17: #{f_basic_block_forward.4} parent=5 // pred_check
      %p145 = pneg %p144
    $region18: #{f_basic_block_forward.4} parent=5 // pred_check_branch
      %147 = sbr.rel (%p145) target = $region20
    $region19: #{f_basic_block_forward.4} parent=5 // pred_region
      // Predicated region
      $region21: #{f_basic_block_forward.4} parent=19 // pred_check
        %p148 = pneg %p31
      $region22: #{f_basic_block_forward.4} parent=19 // pred_check_branch
        %150 = sbr.rel (%p148) target = $region24
      $region23: #{f_basic_block_forward.4} parent=19 // pred_region
        %s151 = smul.u32 8, %s11
        %p152 = scmp.lt.s32.totalorder %s151, 15
        %s153 = scalar_select %p152, %s151, 15
        %s154 = smul.addr %s153, 4
        %s155 = scalar_lea.vmem %s0, %s154
        %s156 = smul.u32 8, %s11
      $region24: #{f_basic_block_forward.4} parent=19 // pred_fallthru
        _
    $region20: #{f_basic_block_forward.4} parent=5 // pred_fallthru
      _
    %p157 = scmp.le.s32.totalorder 1, %s11
    %p158 = scmp.lt.s32.totalorder %s11, 3
    %p159 = pnand %p157, %p158
    %p160 = pneg %p159
    // Predicated region
    $region25: #{f_basic_block_forward.4} parent=5 // pred_check
      _
    $region26: #{f_basic_block_forward.4} parent=5 // pred_check_branch
      %162 = sbr.rel (%p159) target = $region28
    $region27: #{f_basic_block_forward.4} parent=5 // pred_region
      %s163 = ssub.s32 %s11, 1
      %s164 = smul.u32 8, %s16
      %p165 = scmp.lt.s32.totalorder %s164, 15
      %s166 = scalar_select %p165, %s164, 15
      %s167 = smul.addr %s166, 4
      %s168 = scalar_lea.vmem %s0, %s167
      %p169 = pneg %p37
      %p170 = pneg %p34
      %p171 = pneg %p58
      %p172 = pneg %p55
      %p173 = pneg %p84
      %p174 = pneg %p81
      %s175 = smul.u32 8, %s16
      %p176 = scmp.lt.s32.totalorder %s175, 15
      %s177 = scalar_select %p176, %s175, 15
      %s178 = smul.addr %s177, 8
      %s179 = scalar_lea.vmem %s2, %s178
      %p180 = pneg %p105
      %p181 = pneg %p102
      %p182 = pneg %p126
      %p183 = pneg %p123
      %s184 = smul.u32 8, %s16
      %p185 = scmp.lt.s32.totalorder %s184, 15
      %s186 = scalar_select %p185, %s184, 15
      %s187 = smul.addr %s186, 4
      %s188 = scalar_lea.vmem %s0, %s187
      %s189 = smul.u32 8, %s16
      %s190 = smul.u32 8, %s16
      %p191 = scmp.lt.s32.totalorder %s190, 15
      %s192 = scalar_select %p191, %s190, 15
      %s193 = smul.addr %s192, 8
      %s194 = scalar_lea.vmem %s2, %s193
      %s195 = smul.u32 8, %s16
      %v196 = vld [vmem:[%s188] sm:$0xf]
      %v197 = vld [vmem:[%s188 + $0x4] sm:$0xf]
      %v198 = vld [vmem:[%s188 + $0x8] sm:$0xf]
      %v199 = vld [vmem:[%s188 + $0xc] sm:$0xf]
      %v200 = vld [vmem:[%s188 + $0x10] sm:$0xf]
      %v201 = vld [vmem:[%s188 + $0x14] sm:$0xf]
      %v202 = vld [vmem:[%s188 + $0x18] sm:$0xf]
      %v203 = vld [vmem:[%s188 + $0x1c] sm:$0xf]
      %v204 = vld [vmem:[%s1] sm:$0xf]
      %v205 = vld [vmem:[%s1 + $0x4] sm:$0xf]
      %v206 = vld [vmem:[%s1 + $0x8] sm:$0xf]
      %v207 = vld [vmem:[%s1 + $0xc] sm:$0xf]
      %v208 = vld [vmem:[%s1 + $0x10] sm:$0xf]
      %v209 = vld [vmem:[%s1 + $0x14] sm:$0xf]
      %v210 = vld [vmem:[%s1 + $0x18] sm:$0xf]
      %v211 = vld [vmem:[%s1 + $0x1c] sm:$0xf]
      %v212 = vld [vmem:[%s1 + $0x20] sm:$0xf]
      %v213 = vld [vmem:[%s1 + $0x24] sm:$0xf]
      %v214 = vld [vmem:[%s1 + $0x28] sm:$0xf]
      %v215 = vld [vmem:[%s1 + $0x2c] sm:$0xf]
      %v216 = vld [vmem:[%s1 + $0x30] sm:$0xf]
      %v217 = vld [vmem:[%s1 + $0x34] sm:$0xf]
      %v218 = vld [vmem:[%s1 + $0x38] sm:$0xf]
      %v219 = vld [vmem:[%s1 + $0x3c] sm:$0xf]
      %v228 = vunpack.c.l.b16 %v196
      %v229 = vunpack.c.l.b16 %v197
      %v230 = vunpack.c.l.b16 %v198
      %v231 = vunpack.c.l.b16 %v199
      %v232 = vunpack.c.l.b16 %v200
      %v233 = vunpack.c.l.b16 %v201
      %v234 = vunpack.c.l.b16 %v202
      %v235 = vunpack.c.l.b16 %v203
      %v236 = vpack.c.b16 %v229, %v228
      %v237 = vpack.c.b16 %v231, %v230
      %v238 = vpack.c.b16 %v233, %v232
      %v239 = vpack.c.b16 %v235, %v234
      %v260 = vunpack.c.l.b16 %v204
      %v261 = vunpack.c.l.b16 %v205
      %v262 = vunpack.c.l.b16 %v206
      %v263 = vunpack.c.l.b16 %v207
      %v264 = vunpack.c.l.b16 %v208
      %v265 = vunpack.c.l.b16 %v209
      %v266 = vunpack.c.l.b16 %v210
      %v267 = vunpack.c.l.b16 %v211
      %v268 = vunpack.c.l.b16 %v212
      %v269 = vunpack.c.l.b16 %v213
      %v270 = vunpack.c.l.b16 %v214
      %v271 = vunpack.c.l.b16 %v215
      %v272 = vunpack.c.l.b16 %v216
      %v273 = vunpack.c.l.b16 %v217
      %v274 = vunpack.c.l.b16 %v218
      %v275 = vunpack.c.l.b16 %v219
      %v276 = vpack.c.b16 %v261, %v260
      %v277 = vpack.c.b16 %v263, %v262
      %v278 = vpack.c.b16 %v265, %v264
      %v279 = vpack.c.b16 %v267, %v266
      %v280 = vpack.c.b16 %v269, %v268
      %v281 = vpack.c.b16 %v271, %v270
      %v282 = vpack.c.b16 %v273, %v272
      %v283 = vpack.c.b16 %v275, %v274
      %292 = vmatpush.bf16.msra.mxu0 %v283
      %293 = vmatpush.bf16.msra.mxu0 %v282
      %294 = vmatpush.bf16.msra.mxu0 %v281
      %295 = vmatpush.bf16.msra.mxu0 %v280
      %296 = vmatpush.bf16.msra.mxu0 %v279
      %297 = vmatpush.bf16.msra.mxu0 %v278
      %298 = vmatpush.bf16.msra.mxu0 %v277
      %299 = vmatpush.bf16.msra.mxu0 %v276
      %300 = vmatmul.bf16.gmra.mxu0 %v236
      %v301 = vpop.f32.mrf.mxu0
      %v302 = vadd.f32 0.0, %v301
      %v303 = vpop.f32.mrf.mxu0
      %v304 = vadd.f32 0.0, %v303
      %305 = vmatmul.bf16.gmra.mxu0 %v237
      %v306 = vpop.f32.mrf.mxu0
      %v307 = vadd.f32 0.0, %v306
      %v308 = vpop.f32.mrf.mxu0
      %v309 = vadd.f32 0.0, %v308
      %310 = vmatmul.bf16.gmra.mxu0 %v238
      %v311 = vpop.f32.mrf.mxu0
      %v312 = vadd.f32 0.0, %v311
      %v313 = vpop.f32.mrf.mxu0
      %v314 = vadd.f32 0.0, %v313
      %315 = vmatmul.bf16.gmra.mxu0 %v239
      %v316 = vpop.f32.mrf.mxu0
      %v317 = vadd.f32 0.0, %v316
      %v318 = vpop.f32.mrf.mxu0
      %v319 = vadd.f32 0.0, %v318
      %320 = vdwg.mxu0
      %321 = vst [vmem:[%s194] sm:$0xff] %v302
      %322 = vst [vmem:[%s194 + $0x8] sm:$0xff] %v304
      %323 = vst [vmem:[%s194 + $0x10] sm:$0xff] %v307
      %324 = vst [vmem:[%s194 + $0x18] sm:$0xff] %v309
      %325 = vst [vmem:[%s194 + $0x20] sm:$0xff] %v312
      %326 = vst [vmem:[%s194 + $0x28] sm:$0xff] %v314
      %327 = vst [vmem:[%s194 + $0x30] sm:$0xff] %v317
      %328 = vst [vmem:[%s194 + $0x38] sm:$0xff] %v319
      %p329 = scmp.eq.s32.totalorder %s16, 0
      // Predicated region
      $region29: #{f_basic_block_forward.4} parent=27 // pred_check
        %p330 = pneg %p329
      $region30: #{f_basic_block_forward.4} parent=27 // pred_check_branch
        %332 = sbr.rel (%p330) target = $region32
      $region31: #{f_basic_block_forward.4} parent=27 // pred_region
        %333 = vst [vmem:[%s3] sm:$0x1] 0.0
        %334 = vst [vmem:[%s4] sm:$0x1] 0.0
      $region32: #{f_basic_block_forward.4} parent=27 // pred_fallthru
        _
      %v335 = vld [vmem:[%s3] sm:$0x1]
      %v336 = vadd.f32 %v302, %v304
      %v337 = vadd.f32 %v336, %v307
      %v338 = vadd.f32 %v337, %v309
      %v339 = vadd.f32 %v338, %v312
      %v340 = vadd.f32 %v339, %v314
      %v341 = vadd.f32 %v340, %v317
      %v342 = vadd.f32 %v341, %v319
      %v343 = vrot.slane %v342, 4
      %v344 = vadd.f32 %v342, %v343
      %v345 = vrot.slane %v344, 2
      %v346 = vadd.f32 %v344, %v345
      %v347 = vrot.slane %v346, 1
      %v348 = vadd.f32 %v346, %v347
      %v349 = vadd.f32 %v335, %v348
      %350 = vst [vmem:[%s3] sm:$0x1] %v349
      %v351 = vld [vmem:[%s4] sm:$0x1]
      %v352 = vmul.f32 %v302, %v302
      %v353 = vmul.f32 %v304, %v304
      %v354 = vmul.f32 %v307, %v307
      %v355 = vmul.f32 %v309, %v309
      %v356 = vmul.f32 %v312, %v312
      %v357 = vmul.f32 %v314, %v314
      %v358 = vmul.f32 %v317, %v317
      %v359 = vmul.f32 %v319, %v319
      %v360 = vadd.f32 %v352, %v353
      %v361 = vadd.f32 %v360, %v354
      %v362 = vadd.f32 %v361, %v355
      %v363 = vadd.f32 %v362, %v356
      %v364 = vadd.f32 %v363, %v357
      %v365 = vadd.f32 %v364, %v358
      %v366 = vadd.f32 %v365, %v359
      %v367 = vrot.slane %v366, 4
      %v368 = vadd.f32 %v366, %v367
      %v369 = vrot.slane %v368, 2
      %v370 = vadd.f32 %v368, %v369
      %v371 = vrot.slane %v370, 1
      %v372 = vadd.f32 %v370, %v371
      %v373 = vadd.f32 %v351, %v372
      %374 = vst [vmem:[%s4] sm:$0x1] %v373
      %s375 = smul.u32 8, %s16
      %p376 = scmp.lt.s32.totalorder %s375, 15
      %s377 = scalar_select %p376, %s375, 15
      %s378 = smul.addr %s377, 8
      %s379 = scalar_lea.vmem %s2, %s378
      // Predicated region
      $region33: #{f_basic_block_forward.4} parent=27 // pred_check
        %p380 = pneg %p81
      $region34: #{f_basic_block_forward.4} parent=27 // pred_check_branch
        %382 = sbr.rel (%p380) target = $region36
      $region35: #{f_basic_block_forward.4} parent=27 // pred_region
        %s383 = smul.u32 8, %s16
      $region36: #{f_basic_block_forward.4} parent=27 // pred_fallthru
        _
      // Predicated region
      $region37: #{f_basic_block_forward.4} parent=27 // pred_check
        %p384 = pneg %p102
      $region38: #{f_basic_block_forward.4} parent=27 // pred_check_branch
        %386 = sbr.rel (%p384) target = $region40
      $region39: #{f_basic_block_forward.4} parent=27 // pred_region
        _
      $region40: #{f_basic_block_forward.4} parent=27 // pred_fallthru
        _
      // Predicated region
      $region41: #{f_basic_block_forward.4} parent=27 // pred_check
        %p387 = pneg %p123
      $region42: #{f_basic_block_forward.4} parent=27 // pred_check_branch
        %389 = sbr.rel (%p387) target = $region44
      $region43: #{f_basic_block_forward.4} parent=27 // pred_region
        _
      $region44: #{f_basic_block_forward.4} parent=27 // pred_fallthru
        _
      // Predicated region
      $region45: #{f_basic_block_forward.4} parent=27 // pred_check
        %p390 = pneg %p102
      $region46: #{f_basic_block_forward.4} parent=27 // pred_check_branch
        %392 = sbr.rel (%p390) target = $region48
      $region47: #{f_basic_block_forward.4} parent=27 // pred_region
        _
      $region48: #{f_basic_block_forward.4} parent=27 // pred_fallthru
        _
      // Predicated region
      $region49: #{f_basic_block_forward.4} parent=27 // pred_check
        %p393 = pneg %p123
      $region50: #{f_basic_block_forward.4} parent=27 // pred_check_branch
        %395 = sbr.rel (%p393) target = $region52
      $region51: #{f_basic_block_forward.4} parent=27 // pred_region
        _
      $region52: #{f_basic_block_forward.4} parent=27 // pred_fallthru
        _
    $region28: #{f_basic_block_forward.4} parent=5 // pred_fallthru
      _
    %p396 = scmp.le.s32.totalorder 2, %s11
    // Predicated region
    $region53: #{f_basic_block_forward.4} parent=5 // pred_check
      %p397 = pneg %p396
    $region54: #{f_basic_block_forward.4} parent=5 // pred_check_branch
      %399 = sbr.rel (%p397) target = $region56
    $region55: #{f_basic_block_forward.4} parent=5 // pred_region
      %s400 = ssub.s32 %s11, 2
      // Predicated region
      $region57: #{f_basic_block_forward.4} parent=55 // pred_check
        %p401 = pneg %p87
      $region58: #{f_basic_block_forward.4} parent=55 // pred_check_branch
        %403 = sbr.rel (%p401) target = $region60
      $region59: #{f_basic_block_forward.4} parent=55 // pred_region
        %s404 = smul.u32 8, %s17
        %p405 = scmp.lt.s32.totalorder %s404, 15
        %s406 = scalar_select %p405, %s404, 15
        %s407 = smul.addr %s406, 8
        %s408 = scalar_lea.vmem %s2, %s407
      $region60: #{f_basic_block_forward.4} parent=55 // pred_fallthru
        _
    $region56: #{f_basic_block_forward.4} parent=5 // pred_fallthru
      _
  $region6: #{f_basic_block_forward.4} parent=0 // loop_footer
    %s15 = sadd.s32 1, %s11
  $region7: #{f_basic_block_forward.4} parent=0 // loop_footer_branch
    %10 = sbr.rel target = $region3
  $region8: #{f_basic_block_forward.4} parent=0 // loop_exit
    _

// kernel: f_basic_block_forward.7
$region0: #{f_basic_block_forward.7}
  #allocation0 [shape = 'u32[]', space=smem, size = 0x4, offset = 0x4, fixed_abs, tag = 'smem constant byte address 0x4 - core index']
  #allocation1 [shape = 'u32[72,128]{1,0:T(1,128)}', space=vmem, size = 0x9000, scoped, tag = 'internal scratch']
  %s0 = inlined_call_operand.vmem [shape: f32[128,128], index: 0, kind: input, shape index: {}]
  %s1 = inlined_call_operand.vmem [shape: f32[1,128], index: 1, kind: input, shape index: {}]
  %s2 = inlined_call_operand.vmem [shape: f32[1,128], index: 2, kind: input, shape index: {}]
  %s3 = inlined_call_operand.vmem [shape: f32[128,128], index: 3, kind: input, shape index: {}]
  %s4 = inlined_call_operand.vmem [shape: f32[128,128], index: 4, kind: output, shape index: {}]
  %s5 = sld [smem:[#allocation0]]
  $region49: #{f_basic_block_forward.7} parent=0
    _
  %s7 = ssub.s32 1, %s5
  %s8 = scalar_select 0, %s7, %s5
  loop: start=0, step=1, limit=4
  $region2: #{f_basic_block_forward.7} parent=0 // loop_pre_header
    _
  $region3: #{f_basic_block_forward.7} parent=0 // loop_header
    %s10 = sphi 0, %s14
    %p11 = scmp.ge.s32.totalorder %s10, 4
    %s20 = sphi 0, %s22
    %s23 = sphi 0, %s20
    %s24 = sphi 0, %s23
    %s40 = sphi 0, %s24
    %s44 = sphi 0, %s44
    %s46 = sphi 0, %s44
    %s47 = sphi 0, %s46
    %s61 = sphi 0, %s47
    %s65 = sphi 0, %s65
    %s67 = sphi 0, %s65
    %s68 = sphi 0, %s67
    %s82 = sphi 0, %s68
    %s88 = sphi 0, %s90
    %s91 = sphi 0, %s88
    %s92 = sphi 0, %s91
    %s108 = sphi 0, %s92
    %s114 = sphi 0, %s116
    %s117 = sphi 0, %s114
    %s118 = sphi 0, %s117
    %s134 = sphi 0, %s118
  $region4: #{f_basic_block_forward.7} parent=0 // loop_header_branch
    %13 = sbr.rel (%p11) target = $region8
  $region5: #{f_basic_block_forward.7} parent=0 // loop_body
    %s15 = ssub.s32 %s10, 1
    %s16 = ssub.s32 %s10, 2
    %s17 = sadd.s32 %s10, 1
    %s18 = ssub.s32 %s10, %s17
    %p19 = scmp.eq.s32.totalorder %s18, 0
    %s21 = sadd.s32 %s20, 1
    %s22 = scalar_select %p19, %s20, %s21
    %p25 = pneg %p19
    %p26 = scmp.eq.s32.totalorder %s10, 1
    %p27 = por %p25, %p26
    %p28 = scmp.ne.s32.totalorder %s20, %s23
    %p29 = scmp.eq.s32.totalorder %s10, 0
    %p30 = por %p28, %p29
    %p31 = scmp.ne.s32.totalorder %s20, %s23
    %p32 = scmp.eq.s32.totalorder %s15, 1
    %p33 = por %p31, %p32
    %p34 = scmp.ne.s32.totalorder %s23, %s24
    %p35 = scmp.eq.s32.totalorder %s15, 0
    %p36 = por %p34, %p35
    %p37 = scmp.ne.s32.totalorder %s23, %s24
    %p38 = scmp.eq.s32.totalorder %s16, 1
    %p39 = por %p37, %p38
    %p41 = scmp.ne.s32.totalorder %s24, %s40
    %p42 = scmp.eq.s32.totalorder %s16, 0
    %p43 = por %p41, %p42
    %s45 = sadd.s32 %s44, 1
    %p48 = scmp.eq.s32.totalorder %s10, 1
    %p49 = scmp.ne.s32.totalorder %s44, %s46
    %p50 = scmp.eq.s32.totalorder %s10, 0
    %p51 = por %p49, %p50
    %p52 = scmp.ne.s32.totalorder %s44, %s46
    %p53 = scmp.eq.s32.totalorder %s15, 1
    %p54 = por %p52, %p53
    %p55 = scmp.ne.s32.totalorder %s46, %s47
    %p56 = scmp.eq.s32.totalorder %s15, 0
    %p57 = por %p55, %p56
    %p58 = scmp.ne.s32.totalorder %s46, %s47
    %p59 = scmp.eq.s32.totalorder %s16, 1
    %p60 = por %p58, %p59
    %p62 = scmp.ne.s32.totalorder %s47, %s61
    %p63 = scmp.eq.s32.totalorder %s16, 0
    %p64 = por %p62, %p63
    %s66 = sadd.s32 %s65, 1
    %p69 = scmp.eq.s32.totalorder %s10, 1
    %p70 = scmp.ne.s32.totalorder %s65, %s67
    %p71 = scmp.eq.s32.totalorder %s10, 0
    %p72 = por %p70, %p71
    %p73 = scmp.ne.s32.totalorder %s65, %s67
    %p74 = scmp.eq.s32.totalorder %s15, 1
    %p75 = por %p73, %p74
    %p76 = scmp.ne.s32.totalorder %s67, %s68
    %p77 = scmp.eq.s32.totalorder %s15, 0
    %p78 = por %p76, %p77
    %p79 = scmp.ne.s32.totalorder %s67, %s68
    %p80 = scmp.eq.s32.totalorder %s16, 1
    %p81 = por %p79, %p80
    %p83 = scmp.ne.s32.totalorder %s68, %s82
    %p84 = scmp.eq.s32.totalorder %s16, 0
    %p85 = por %p83, %p84
    %s86 = ssub.s32 %s10, %s17
    %p87 = scmp.eq.s32.totalorder %s86, 0
    %s89 = sadd.s32 %s88, 1
    %s90 = scalar_select %p87, %s88, %s89
    %p93 = pneg %p87
    %p94 = scmp.eq.s32.totalorder %s10, 1
    %p95 = por %p93, %p94
    %p96 = scmp.ne.s32.totalorder %s88, %s91
    %p97 = scmp.eq.s32.totalorder %s10, 0
    %p98 = por %p96, %p97
    %p99 = scmp.ne.s32.totalorder %s88, %s91
    %p100 = scmp.eq.s32.totalorder %s15, 1
    %p101 = por %p99, %p100
    %p102 = scmp.ne.s32.totalorder %s91, %s92
    %p103 = scmp.eq.s32.totalorder %s15, 0
    %p104 = por %p102, %p103
    %p105 = scmp.ne.s32.totalorder %s91, %s92
    %p106 = scmp.eq.s32.totalorder %s16, 1
    %p107 = por %p105, %p106
    %p109 = scmp.ne.s32.totalorder %s92, %s108
    %p110 = scmp.eq.s32.totalorder %s16, 0
    %p111 = por %p109, %p110
    %s112 = ssub.s32 %s10, %s17
    %p113 = scmp.eq.s32.totalorder %s112, 0
    %s115 = sadd.s32 %s114, 1
    %s116 = scalar_select %p113, %s114, %s115
    %p119 = pneg %p113
    %p120 = scmp.eq.s32.totalorder %s10, 1
    %p121 = por %p119, %p120
    %p122 = scmp.ne.s32.totalorder %s114, %s117
    %p123 = scmp.eq.s32.totalorder %s10, 0
    %p124 = por %p122, %p123
    %p125 = scmp.ne.s32.totalorder %s114, %s117
    %p126 = scmp.eq.s32.totalorder %s15, 1
    %p127 = por %p125, %p126
    %p128 = scmp.ne.s32.totalorder %s117, %s118
    %p129 = scmp.eq.s32.totalorder %s15, 0
    %p130 = por %p128, %p129
    %p131 = scmp.ne.s32.totalorder %s117, %s118
    %p132 = scmp.eq.s32.totalorder %s16, 1
    %p133 = por %p131, %p132
    %p135 = scmp.ne.s32.totalorder %s118, %s134
    %p136 = scmp.eq.s32.totalorder %s16, 0
    %p137 = por %p135, %p136
    %p138 = scmp.le.s32.totalorder 1, %s10
    %p139 = scmp.lt.s32.totalorder %s10, 3
    %p140 = pnand %p138, %p139
    %p141 = pneg %p140
    // Predicated region
    $region9: #{f_basic_block_forward.7} parent=5 // pred_check
      _
    $region10: #{f_basic_block_forward.7} parent=5 // pred_check_branch
      %143 = sbr.rel (%p140) target = $region12
    $region11: #{f_basic_block_forward.7} parent=5 // pred_region
      %s144 = ssub.s32 %s10, 1
      // Predicated region
      $region13: #{f_basic_block_forward.7} parent=11 // pred_check
        %p145 = pneg %p57
      $region14: #{f_basic_block_forward.7} parent=11 // pred_check_branch
        %147 = sbr.rel (%p145) target = $region16
      $region15: #{f_basic_block_forward.7} parent=11 // pred_region
        _
      $region16: #{f_basic_block_forward.7} parent=11 // pred_fallthru
        _
      // Predicated region
      $region17: #{f_basic_block_forward.7} parent=11 // pred_check
        %p148 = pneg %p78
      $region18: #{f_basic_block_forward.7} parent=11 // pred_check_branch
        %150 = sbr.rel (%p148) target = $region20
      $region19: #{f_basic_block_forward.7} parent=11 // pred_region
        _
      $region20: #{f_basic_block_forward.7} parent=11 // pred_fallthru
        _
    $region12: #{f_basic_block_forward.7} parent=5 // pred_fallthru
      _
    %p151 = scmp.lt.s32.totalorder %s10, 2
    // Predicated region
    $region21: #{f_basic_block_forward.7} parent=5 // pred_check
      %p152 = pneg %p151
    $region22: #{f_basic_block_forward.7} parent=5 // pred_check_branch
      %154 = sbr.rel (%p152) target = $region24
    $region23: #{f_basic_block_forward.7} parent=5 // pred_region
      // Predicated region
      $region25: #{f_basic_block_forward.7} parent=23 // pred_check
        %p155 = pneg %p30
      $region26: #{f_basic_block_forward.7} parent=23 // pred_check_branch
        %157 = sbr.rel (%p155) target = $region28
      $region27: #{f_basic_block_forward.7} parent=23 // pred_region
        %s158 = smul.u32 8, %s10
        %p159 = scmp.lt.s32.totalorder %s158, 15
        %s160 = scalar_select %p159, %s158, 15
        %s161 = smul.addr %s160, 8
        %s162 = scalar_lea.vmem %s0, %s161
        %s163 = smul.u32 8, %s10
      $region28: #{f_basic_block_forward.7} parent=23 // pred_fallthru
        _
      // Predicated region
      $region29: #{f_basic_block_forward.7} parent=23 // pred_check
        %p164 = pneg %p98
      $region30: #{f_basic_block_forward.7} parent=23 // pred_check_branch
        %166 = sbr.rel (%p164) target = $region32
      $region31: #{f_basic_block_forward.7} parent=23 // pred_region
        %s167 = smul.u32 8, %s10
        %p168 = scmp.lt.s32.totalorder %s167, 15
        %s169 = scalar_select %p168, %s167, 15
        %s170 = smul.addr %s169, 8
        %s171 = scalar_lea.vmem %s3, %s170
        %s172 = smul.u32 8, %s10
      $region32: #{f_basic_block_forward.7} parent=23 // pred_fallthru
        _
    $region24: #{f_basic_block_forward.7} parent=5 // pred_fallthru
      _
    %p173 = scmp.le.s32.totalorder 1, %s10
    %p174 = scmp.lt.s32.totalorder %s10, 3
    %p175 = pnand %p173, %p174
    %p176 = pneg %p175
    // Predicated region
    $region33: #{f_basic_block_forward.7} parent=5 // pred_check
      _
    $region34: #{f_basic_block_forward.7} parent=5 // pred_check_branch
      %178 = sbr.rel (%p175) target = $region36
    $region35: #{f_basic_block_forward.7} parent=5 // pred_region
      %s179 = ssub.s32 %s10, 1
      %s180 = smul.u32 8, %s15
      %p181 = scmp.lt.s32.totalorder %s180, 15
      %s182 = scalar_select %p181, %s180, 15
      %s183 = smul.addr %s182, 8
      %s184 = scalar_lea.vmem %s0, %s183
      %p185 = pneg %p36
      %p186 = pneg %p33
      %p187 = pneg %p57
      %p188 = pneg %p54
      %p189 = pneg %p78
      %p190 = pneg %p75
      %s191 = smul.u32 8, %s15
      %p192 = scmp.lt.s32.totalorder %s191, 15
      %s193 = scalar_select %p192, %s191, 15
      %s194 = smul.addr %s193, 8
      %s195 = scalar_lea.vmem %s3, %s194
      %p196 = pneg %p104
      %p197 = pneg %p101
      %p198 = pneg %p130
      %p199 = pneg %p127
      %s200 = smul.u32 8, %s15
      %p201 = scmp.lt.s32.totalorder %s200, 15
      %s202 = scalar_select %p201, %s200, 15
      %s203 = smul.addr %s202, 8
      %s204 = scalar_lea.vmem %s4, %s203
      %s205 = smul.u32 8, %s15
      %p206 = scmp.lt.s32.totalorder %s205, 15
      %s207 = scalar_select %p206, %s205, 15
      %s208 = smul.addr %s207, 8
      %s209 = scalar_lea.vmem %s0, %s208
      %s210 = smul.u32 8, %s15
      %s211 = smul.u32 8, %s15
      %p212 = scmp.lt.s32.totalorder %s211, 15
      %s213 = scalar_select %p212, %s211, 15
      %s214 = smul.addr %s213, 8
      %s215 = scalar_lea.vmem %s3, %s214
      %s216 = smul.u32 8, %s15
      %s217 = smul.u32 8, %s15
      %p218 = scmp.lt.s32.totalorder %s217, 15
      %s219 = scalar_select %p218, %s217, 15
      %s220 = smul.addr %s219, 8
      %s221 = scalar_lea.vmem %s4, %s220
      %s222 = smul.u32 8, %s15
      %v223 = vld [vmem:[%s209] sm:$0xff]
      %v224 = vld [vmem:[%s209 + $0x8] sm:$0xff]
      %v225 = vld [vmem:[%s209 + $0x10] sm:$0xff]
      %v226 = vld [vmem:[%s209 + $0x18] sm:$0xff]
      %v227 = vld [vmem:[%s209 + $0x20] sm:$0xff]
      %v228 = vld [vmem:[%s209 + $0x28] sm:$0xff]
      %v229 = vld [vmem:[%s209 + $0x30] sm:$0xff]
      %v230 = vld [vmem:[%s209 + $0x38] sm:$0xff]
      %v231 = vld [vmem:[%s1] sm:$0x1]
      %v233 = vperm.slane %v231, 0
      %v235 = vmul.f32 %v223, %v233
      %v236 = vmul.f32 %v224, %v233
      %v237 = vmul.f32 %v225, %v233
      %v238 = vmul.f32 %v226, %v233
      %v239 = vmul.f32 %v227, %v233
      %v240 = vmul.f32 %v228, %v233
      %v241 = vmul.f32 %v229, %v233
      %v242 = vmul.f32 %v230, %v233
      %v243 = vld [vmem:[%s2] sm:$0x1]
      %v245 = vperm.slane %v243, 0
      %v247 = vadd.f32 %v235, %v245
      %v248 = vadd.f32 %v236, %v245
      %v249 = vadd.f32 %v237, %v245
      %v250 = vadd.f32 %v238, %v245
      %v251 = vadd.f32 %v239, %v245
      %v252 = vadd.f32 %v240, %v245
      %v253 = vadd.f32 %v241, %v245
      %v254 = vadd.f32 %v242, %v245
      %v255 = vld [vmem:[%s215] sm:$0xff]
      %v256 = vld [vmem:[%s215 + $0x8] sm:$0xff]
      %v257 = vld [vmem:[%s215 + $0x10] sm:$0xff]
      %v258 = vld [vmem:[%s215 + $0x18] sm:$0xff]
      %v259 = vld [vmem:[%s215 + $0x20] sm:$0xff]
      %v260 = vld [vmem:[%s215 + $0x28] sm:$0xff]
      %v261 = vld [vmem:[%s215 + $0x30] sm:$0xff]
      %v262 = vld [vmem:[%s215 + $0x38] sm:$0xff]
      %v263 = vadd.f32 %v247, %v255
      %v264 = vadd.f32 %v248, %v256
      %v265 = vadd.f32 %v249, %v257
      %v266 = vadd.f32 %v250, %v258
      %v267 = vadd.f32 %v251, %v259
      %v268 = vadd.f32 %v252, %v260
      %v269 = vadd.f32 %v253, %v261
      %v270 = vadd.f32 %v254, %v262
      %v271 = vmax.f32 %v263, 0.0
      %v272 = vmax.f32 %v264, 0.0
      %v273 = vmax.f32 %v265, 0.0
      %v274 = vmax.f32 %v266, 0.0
      %v275 = vmax.f32 %v267, 0.0
      %v276 = vmax.f32 %v268, 0.0
      %v277 = vmax.f32 %v269, 0.0
      %v278 = vmax.f32 %v270, 0.0
      %279 = vst [vmem:[%s221] sm:$0xff] %v271
      %280 = vst [vmem:[%s221 + $0x8] sm:$0xff] %v272
      %281 = vst [vmem:[%s221 + $0x10] sm:$0xff] %v273
      %282 = vst [vmem:[%s221 + $0x18] sm:$0xff] %v274
      %283 = vst [vmem:[%s221 + $0x20] sm:$0xff] %v275
      %284 = vst [vmem:[%s221 + $0x28] sm:$0xff] %v276
      %285 = vst [vmem:[%s221 + $0x30] sm:$0xff] %v277
      %286 = vst [vmem:[%s221 + $0x38] sm:$0xff] %v278
      %s287 = smul.u32 8, %s15
      %p288 = scmp.lt.s32.totalorder %s287, 15
      %s289 = scalar_select %p288, %s287, 15
      %s290 = smul.addr %s289, 8
      %s291 = scalar_lea.vmem %s4, %s290
      // Predicated region
      $region37: #{f_basic_block_forward.7} parent=35 // pred_check
        %p292 = pneg %p127
      $region38: #{f_basic_block_forward.7} parent=35 // pred_check_branch
        %294 = sbr.rel (%p292) target = $region40
      $region39: #{f_basic_block_forward.7} parent=35 // pred_region
        %s295 = smul.u32 8, %s15
      $region40: #{f_basic_block_forward.7} parent=35 // pred_fallthru
        _
    $region36: #{f_basic_block_forward.7} parent=5 // pred_fallthru
      _
    %p296 = scmp.le.s32.totalorder 2, %s10
    // Predicated region
    $region41: #{f_basic_block_forward.7} parent=5 // pred_check
      %p297 = pneg %p296
    $region42: #{f_basic_block_forward.7} parent=5 // pred_check_branch
      %299 = sbr.rel (%p297) target = $region44
    $region43: #{f_basic_block_forward.7} parent=5 // pred_region
      %s300 = ssub.s32 %s10, 2
      // Predicated region
      $region45: #{f_basic_block_forward.7} parent=43 // pred_check
        %p301 = pneg %p133
      $region46: #{f_basic_block_forward.7} parent=43 // pred_check_branch
        %303 = sbr.rel (%p301) target = $region48
      $region47: #{f_basic_block_forward.7} parent=43 // pred_region
        %s304 = smul.u32 8, %s16
        %p305 = scmp.lt.s32.totalorder %s304, 15
        %s306 = scalar_select %p305, %s304, 15
        %s307 = smul.addr %s306, 8
        %s308 = scalar_lea.vmem %s4, %s307
      $region48: #{f_basic_block_forward.7} parent=43 // pred_fallthru
        _
    $region44: #{f_basic_block_forward.7} parent=5 // pred_fallthru
      _
  $region6: #{f_basic_block_forward.7} parent=0 // loop_footer
    %s14 = sadd.s32 1, %s10
  $region7: #{f_basic_block_forward.7} parent=0 // loop_footer_branch
    %9 = sbr.rel target = $region3
  $region8: #{f_basic_block_forward.7} parent=0 // loop_exit
    _

</llo_original>
